<compile_context>
chip_gen: v7x
topology: tpu7x:2x2x1
jax: 0.10.0
libtpu: 0.0.40
codegen_flags: <defaults>
</compile_context>

<pallas_src>
import functools

import jax
import jax.numpy as jnp
from jax.experimental import pallas as pl
from jax.experimental.pallas import tpu as pltpu  # noqa: F401  (TPU backend)


# --------------------------- Fused CharRNN kernel ----------------------------
def _make_fused_kernel(num_layers, seq_len, batch, hidden_dim, input_dim):
    """All RNN layers (wavefront-fused) + FC epilogue, state held in vregs."""
    L, T, B, H, D = num_layers, seq_len, batch, hidden_dim, input_dim

    def kernel(x_ref, h0_ref, wblk_ref, bias_ref, wih0_ref, b0_ref,
               fcw_ref, fcb_ref, out_ref, hfin_ref):
        # x_ref    : (T*B, D)     time-major flattened input
        # h0_ref   : (L, B, H)    initial hidden
        # wblk_ref : (L*H, L*H)   block wavefront weights (W_hh diag, W_ih super-diag)
        # bias_ref : (1, L*H)     pre-summed biases for layers 1..L-1 (layer-0 slot = 0)
        # wih0_ref : (D, H)       layer-0 W_ih^T
        # b0_ref   : (1, H)       layer-0 b_ih + b_hh
        # fcw_ref  : (H, D)       fc weight, pre-transposed
        # fcb_ref  : (1, D)       fc bias
        # out_ref  : (T*B, D)     fc(output) for every step
        # hfin_ref : (L, B, H)    final hidden per layer

        # Hoisted layer-0 input projection: ONE matmul for the whole sequence,
        # bias folded in.  Per-step pieces are static value slices (no per-step
        # VMEM loads on the serial chain).
        xproj = (jnp.dot(x_ref[...], wih0_ref[...],
                         preferred_element_type=jnp.float32) + b0_ref[...])
        xp = [xproj[t * B:(t + 1) * B, :] for t in range(T)]

        wblk = wblk_ref[...]
        bias = bias_ref[...]

        # Wavefront carries live entirely in vregs.
        carries = [h0_ref[l] for l in range(L)]   # each (B, H)
        last_seq = []                              # h_{L-1}[t], t = 0..T-1

        # Wavefront: at combined step s, layer l advances its time step s-l.
        # One fat (B, L*H) x (L*H, L*H) MXU push per step; chain length T+L-1.
        for s in range(T + L - 1):
            lhs = carries[0] if L == 1 else jnp.concatenate(carries, axis=1)
            r = jnp.dot(lhs, wblk, preferred_element_type=jnp.float32) + bias
            new_carries = list(carries)
            for l in range(L):
                t = s - l
                if 0 <= t < T:                     # static validity gate
                    z = r[:, l * H:(l + 1) * H]
                    if l == 0:
                        z = z + xp[t]
                    h_new = jnp.tanh(z)
                    new_carries[l] = h_new
                    if l == L - 1:
                        last_seq.append(h_new)
            carries = new_carries
            # TODO(synk): training-mode inter-layer dropout not implemented
            # (eval semantics: identity).

        # Final hidden: written once per layer, after the recurrence.
        for l in range(L):
            hfin_ref[l] = carries[l]

        # Fused FC epilogue over the whole last-layer sequence; single store.
        seq = last_seq[0] if T == 1 else jnp.concatenate(last_seq, axis=0)
        out_ref[...] = (jnp.dot(seq, fcw_ref[...],
                                preferred_element_type=jnp.float32)
                        + fcb_ref[...])

    return kernel


# ------------------------------ Python wrapper -------------------------------
@functools.partial(jax.jit, static_argnames=("num_layers",))
def char_rnn_forward(x, hidden, params, num_layers):
    """x: (B, T, input_dim), hidden: (L, B, H).
    Returns (output (B, T, input_dim), hidden (L, B, H))."""
    B, T, D = x.shape
    H = hidden.shape[-1]
    L = num_layers

    # Time-major flattened rows; one tiny XLA transpose outside the kernel.
    x_tm = jnp.transpose(x, (1, 0, 2)).reshape(T * B, D)

    # Layer-0 input weights (pre-transposed) + pre-summed bias.
    w_ih0, _, b_ih0, b_hh0 = params["rnn"][0]
    wih0 = jnp.transpose(w_ih0)                      # (D, H)
    b0 = (b_ih0 + b_hh0).reshape(1, H)

    # Block wavefront weight matrix (L*H, L*H), built once outside the kernel:
    #   column block l:  row block l   -> W_hh_l^T  (recurrent)
    #                    row block l-1 -> W_ih_l^T  (input from layer below)
    wblk = jnp.zeros((L * H, L * H), jnp.float32)
    bias = jnp.zeros((1, L * H), jnp.float32)
    for l in range(L):
        w_ih, w_hh, b_ih, b_hh = params["rnn"][l]
        wblk = wblk.at[l * H:(l + 1) * H, l * H:(l + 1) * H].set(
            jnp.transpose(w_hh))
        if l >= 1:
            wblk = wblk.at[(l - 1) * H:l * H, l * H:(l + 1) * H].set(
                jnp.transpose(w_ih))
            bias = bias.at[0, l * H:(l + 1) * H].set(b_ih + b_hh)

    fc_w_t = jnp.transpose(params["fc_w"])           # (H, D)
    fc_b2 = params["fc_b"].reshape(1, D)

    kernel = _make_fused_kernel(L, T, B, H, D)

    # Advisory cost estimate: helps XLA schedule ops around the custom call.
    flops = (2 * T * B * D * H                       # hoisted input projection
             + 2 * (T + L - 1) * B * (L * H) ** 2    # wavefront recurrence
             + 2 * T * B * H * D)                    # FC epilogue
    bytes_accessed = 4 * (T * B * D + L * B * H + (L * H) ** 2 + L * H
                          + D * H + H + H * D + D
                          + T * B * D + L * B * H)
    cost = pl.CostEstimate(flops=flops,
                           transcendentals=L * T * B * H,
                           bytes_accessed=bytes_accessed)

    # TODO(synk): at production sizes (D=vocab, long T, big B) add a grid over
    # T/B with BlockSpec pipelining, dimension_semantics=("parallel",...) and
    # an explicit vmem_limit_bytes; unnecessary at these VMEM-resident sizes.
    out_flat, h_fin = pl.pallas_call(
        kernel,
        out_shape=(
            jax.ShapeDtypeStruct((T * B, D), jnp.float32),
            jax.ShapeDtypeStruct((L, B, H), jnp.float32),
        ),
        cost_estimate=cost,
    )(x_tm, hidden, wblk, bias, wih0, b0, fc_w_t, fc_b2)

    output = jnp.transpose(out_flat.reshape(T, B, D), (1, 0, 2))   # (B, T, D)
    return output, h_fin


# ------------------------------- Pure-JAX reference --------------------------
def char_rnn_reference(x, hidden, params, num_layers):
    B, T, D = x.shape
    layer_in = x
    h_finals = []
    for l in range(num_layers):
        w_ih, w_hh, b_ih, b_hh = params["rnn"][l]
        h = hidden[l]
        outs = []
        for t in range(T):
            h = jnp.tanh(layer_in[:, t, :] @ w_ih.T + b_ih + h @ w_hh.T + b_hh)
            outs.append(h)
        layer_in = jnp.stack(outs, axis=1)
        h_finals.append(h)
    out = layer_in @ params["fc_w"].T + params["fc_b"]
    return out, jnp.stack(h_finals, axis=0)


# ------------------------------------ Main ------------------------------------
def init_params(key, input_dim, hidden_dim, num_layers):
    """Deterministic init mimicking PyTorch's U(-1/sqrt(H), 1/sqrt(H))."""
    k = 1.0 / jnp.sqrt(jnp.float32(hidden_dim))
    rnn_params = []
    for l in range(num_layers):
        in_dim = input_dim if l == 0 else hidden_dim
        key, k1, k2, k3, k4 = jax.random.split(key, 5)
        w_ih = jax.random.uniform(k1, (hidden_dim, in_dim), jnp.float32, -k, k)
        w_hh = jax.random.uniform(k2, (hidden_dim, hidden_dim), jnp.float32, -k, k)
        b_ih = jax.random.uniform(k3, (hidden_dim,), jnp.float32, -k, k)
        b_hh = jax.random.uniform(k4, (hidden_dim,), jnp.float32, -k, k)
        rnn_params.append((w_ih, w_hh, b_ih, b_hh))
    key, k5, k6 = jax.random.split(key, 3)
    fc_w = jax.random.uniform(k5, (input_dim, hidden_dim), jnp.float32, -k, k)
    fc_b = jax.random.uniform(k6, (input_dim,), jnp.float32, -k, k)
    return {"rnn": rnn_params, "fc_w": fc_w, "fc_b": fc_b}


if __name__ == "__main__":
    input_dim, hidden_dim, num_layers, drop_prob = 16, 32, 2, 0.5  # drop_prob unused (eval)
    batch, seq = 2, 8

    key = jax.random.PRNGKey(0)
    key, kx = jax.random.split(key)
    params = init_params(key, input_dim, hidden_dim, num_layers)

    x = jax.random.normal(kx, (batch, seq, input_dim), jnp.float32)
    hidden0 = jnp.zeros((num_layers, batch, hidden_dim), jnp.float32)  # init_hidden

    out, hid = char_rnn_forward(x, hidden0, params, num_layers)
    out = jax.block_until_ready(out)
    hid = jax.block_until_ready(hid)

    # sanity check against pure-JAX reference
    ref_out, ref_hid = char_rnn_reference(x, hidden0, params, num_layers)
    assert out.shape == (batch, seq, input_dim)
    assert hid.shape == (num_layers, batch, hidden_dim)
    assert jnp.allclose(out, ref_out, atol=1e-5, rtol=1e-5)
    assert jnp.allclose(hid, ref_hid, atol=1e-5, rtol=1e-5)

    print("KERNEL_OK")
</pallas_src>

<mosaic_0001>
module attributes {stable_mosaic.version = 11 : i64} {
  func.func @kernel(%arg0: memref<16x16xf32, #tpu.memory_space<vmem>>, %arg1: memref<2x2x32xf32, #tpu.memory_space<vmem>>, %arg2: memref<64x64xf32, #tpu.memory_space<vmem>>, %arg3: memref<1x64xf32, #tpu.memory_space<vmem>>, %arg4: memref<16x32xf32, #tpu.memory_space<vmem>>, %arg5: memref<1x32xf32, #tpu.memory_space<vmem>>, %arg6: memref<32x16xf32, #tpu.memory_space<vmem>>, %arg7: memref<1x16xf32, #tpu.memory_space<vmem>>, %arg8: memref<16x16xf32, #tpu.memory_space<vmem>>, %arg9: memref<2x2x32xf32, #tpu.memory_space<vmem>>) attributes {dimension_semantics = [], scalar_prefetch = 0 : i64, scratch_operands = 0 : i64, tpu.core_type = #tpu.core_type<tc>} {
    %c0 = arith.constant 0 : index
    %c0_0 = arith.constant 0 : index
    %0 = vector.load %arg0[%c0, %c0_0] : memref<16x16xf32, #tpu.memory_space<vmem>>, vector<16x16xf32>
    %c0_1 = arith.constant 0 : index
    %c0_2 = arith.constant 0 : index
    %1 = vector.load %arg4[%c0_1, %c0_2] : memref<16x32xf32, #tpu.memory_space<vmem>>, vector<16x32xf32>
    %cst = arith.constant dense<0.000000e+00> : vector<16x32xf32>
    %2 = tpu.matmul %0, %1, %cst {dimension_numbers = #tpu.dot_dimension_numbers<[1], [0], [0], [1], [0, 0, 1, 1], [], []>} : vector<16x16xf32>, vector<16x32xf32>, vector<16x32xf32> -> vector<16x32xf32>
    %c0_3 = arith.constant 0 : index
    %c0_4 = arith.constant 0 : index
    %3 = vector.load %arg5[%c0_3, %c0_4] : memref<1x32xf32, #tpu.memory_space<vmem>>, vector<1x32xf32>
    %4 = vector.broadcast %3 : vector<1x32xf32> to vector<16x32xf32>
    %5 = arith.addf %2, %4 : vector<16x32xf32>
    %6 = vector.extract_strided_slice %5 {offsets = [0, 0], sizes = [2, 32], strides = [1, 1]} : vector<16x32xf32> to vector<2x32xf32>
    %7 = vector.extract_strided_slice %5 {offsets = [2, 0], sizes = [2, 32], strides = [1, 1]} : vector<16x32xf32> to vector<2x32xf32>
    %8 = vector.extract_strided_slice %5 {offsets = [4, 0], sizes = [2, 32], strides = [1, 1]} : vector<16x32xf32> to vector<2x32xf32>
    %9 = vector.extract_strided_slice %5 {offsets = [6, 0], sizes = [2, 32], strides = [1, 1]} : vector<16x32xf32> to vector<2x32xf32>
    %10 = vector.extract_strided_slice %5 {offsets = [8, 0], sizes = [2, 32], strides = [1, 1]} : vector<16x32xf32> to vector<2x32xf32>
    %11 = vector.extract_strided_slice %5 {offsets = [10, 0], sizes = [2, 32], strides = [1, 1]} : vector<16x32xf32> to vector<2x32xf32>
    %12 = vector.extract_strided_slice %5 {offsets = [12, 0], sizes = [2, 32], strides = [1, 1]} : vector<16x32xf32> to vector<2x32xf32>
    %13 = vector.extract_strided_slice %5 {offsets = [14, 0], sizes = [2, 32], strides = [1, 1]} : vector<16x32xf32> to vector<2x32xf32>
    %c0_5 = arith.constant 0 : index
    %c0_6 = arith.constant 0 : index
    %14 = vector.load %arg2[%c0_5, %c0_6] : memref<64x64xf32, #tpu.memory_space<vmem>>, vector<64x64xf32>
    %c0_7 = arith.constant 0 : index
    %c0_8 = arith.constant 0 : index
    %15 = vector.load %arg3[%c0_7, %c0_8] : memref<1x64xf32, #tpu.memory_space<vmem>>, vector<1x64xf32>
    %c0_9 = arith.constant 0 : index
    %c0_10 = arith.constant 0 : index
    %c0_11 = arith.constant 0 : index
    %16 = vector.load %arg1[%c0_9, %c0_10, %c0_11] : memref<2x2x32xf32, #tpu.memory_space<vmem>>, vector<1x2x32xf32>
    %17 = vector.shape_cast %16 : vector<1x2x32xf32> to vector<2x32xf32>
    %c1 = arith.constant 1 : index
    %c0_12 = arith.constant 0 : index
    %c0_13 = arith.constant 0 : index
    %18 = vector.load %arg1[%c1, %c0_12, %c0_13] : memref<2x2x32xf32, #tpu.memory_space<vmem>>, vector<1x2x32xf32>
    %19 = vector.shape_cast %18 : vector<1x2x32xf32> to vector<2x32xf32>
    %20 = tpu.concatenate %17, %19 in 1 : vector<2x32xf32>, vector<2x32xf32> -> vector<2x64xf32>
    %cst_14 = arith.constant dense<0.000000e+00> : vector<2x64xf32>
    %21 = tpu.matmul %20, %14, %cst_14 {dimension_numbers = #tpu.dot_dimension_numbers<[1], [0], [0], [1], [0, 0, 1, 1], [], []>} : vector<2x64xf32>, vector<64x64xf32>, vector<2x64xf32> -> vector<2x64xf32>
    %22 = vector.broadcast %15 : vector<1x64xf32> to vector<2x64xf32>
    %23 = arith.addf %21, %22 : vector<2x64xf32>
    %24 = vector.extract_strided_slice %23 {offsets = [0, 0], sizes = [2, 32], strides = [1, 1]} : vector<2x64xf32> to vector<2x32xf32>
    %25 = arith.addf %24, %6 : vector<2x32xf32>
    %26 = math.tanh %25 : vector<2x32xf32>
    %27 = tpu.concatenate %26, %19 in 1 : vector<2x32xf32>, vector<2x32xf32> -> vector<2x64xf32>
    %cst_15 = arith.constant dense<0.000000e+00> : vector<2x64xf32>
    %28 = tpu.matmul %27, %14, %cst_15 {dimension_numbers = #tpu.dot_dimension_numbers<[1], [0], [0], [1], [0, 0, 1, 1], [], []>} : vector<2x64xf32>, vector<64x64xf32>, vector<2x64xf32> -> vector<2x64xf32>
    %29 = vector.broadcast %15 : vector<1x64xf32> to vector<2x64xf32>
    %30 = arith.addf %28, %29 : vector<2x64xf32>
    %31 = vector.extract_strided_slice %30 {offsets = [0, 0], sizes = [2, 32], strides = [1, 1]} : vector<2x64xf32> to vector<2x32xf32>
    %32 = arith.addf %31, %7 : vector<2x32xf32>
    %33 = math.tanh %32 : vector<2x32xf32>
    %34 = vector.extract_strided_slice %30 {offsets = [0, 32], sizes = [2, 32], strides = [1, 1]} : vector<2x64xf32> to vector<2x32xf32>
    %35 = math.tanh %34 : vector<2x32xf32>
    %36 = tpu.concatenate %33, %35 in 1 : vector<2x32xf32>, vector<2x32xf32> -> vector<2x64xf32>
    %cst_16 = arith.constant dense<0.000000e+00> : vector<2x64xf32>
    %37 = tpu.matmul %36, %14, %cst_16 {dimension_numbers = #tpu.dot_dimension_numbers<[1], [0], [0], [1], [0, 0, 1, 1], [], []>} : vector<2x64xf32>, vector<64x64xf32>, vector<2x64xf32> -> vector<2x64xf32>
    %38 = vector.broadcast %15 : vector<1x64xf32> to vector<2x64xf32>
    %39 = arith.addf %37, %38 : vector<2x64xf32>
    %40 = vector.extract_strided_slice %39 {offsets = [0, 0], sizes = [2, 32], strides = [1, 1]} : vector<2x64xf32> to vector<2x32xf32>
    %41 = arith.addf %40, %8 : vector<2x32xf32>
    %42 = math.tanh %41 : vector<2x32xf32>
    %43 = vector.extract_strided_slice %39 {offsets = [0, 32], sizes = [2, 32], strides = [1, 1]} : vector<2x64xf32> to vector<2x32xf32>
    %44 = math.tanh %43 : vector<2x32xf32>
    %45 = tpu.concatenate %42, %44 in 1 : vector<2x32xf32>, vector<2x32xf32> -> vector<2x64xf32>
    %cst_17 = arith.constant dense<0.000000e+00> : vector<2x64xf32>
    %46 = tpu.matmul %45, %14, %cst_17 {dimension_numbers = #tpu.dot_dimension_numbers<[1], [0], [0], [1], [0, 0, 1, 1], [], []>} : vector<2x64xf32>, vector<64x64xf32>, vector<2x64xf32> -> vector<2x64xf32>
    %47 = vector.broadcast %15 : vector<1x64xf32> to vector<2x64xf32>
    %48 = arith.addf %46, %47 : vector<2x64xf32>
    %49 = vector.extract_strided_slice %48 {offsets = [0, 0], sizes = [2, 32], strides = [1, 1]} : vector<2x64xf32> to vector<2x32xf32>
    %50 = arith.addf %49, %9 : vector<2x32xf32>
    %51 = math.tanh %50 : vector<2x32xf32>
    %52 = vector.extract_strided_slice %48 {offsets = [0, 32], sizes = [2, 32], strides = [1, 1]} : vector<2x64xf32> to vector<2x32xf32>
    %53 = math.tanh %52 : vector<2x32xf32>
    %54 = tpu.concatenate %51, %53 in 1 : vector<2x32xf32>, vector<2x32xf32> -> vector<2x64xf32>
    %cst_18 = arith.constant dense<0.000000e+00> : vector<2x64xf32>
    %55 = tpu.matmul %54, %14, %cst_18 {dimension_numbers = #tpu.dot_dimension_numbers<[1], [0], [0], [1], [0, 0, 1, 1], [], []>} : vector<2x64xf32>, vector<64x64xf32>, vector<2x64xf32> -> vector<2x64xf32>
    %56 = vector.broadcast %15 : vector<1x64xf32> to vector<2x64xf32>
    %57 = arith.addf %55, %56 : vector<2x64xf32>
    %58 = vector.extract_strided_slice %57 {offsets = [0, 0], sizes = [2, 32], strides = [1, 1]} : vector<2x64xf32> to vector<2x32xf32>
    %59 = arith.addf %58, %10 : vector<2x32xf32>
    %60 = math.tanh %59 : vector<2x32xf32>
    %61 = vector.extract_strided_slice %57 {offsets = [0, 32], sizes = [2, 32], strides = [1, 1]} : vector<2x64xf32> to vector<2x32xf32>
    %62 = math.tanh %61 : vector<2x32xf32>
    %63 = tpu.concatenate %60, %62 in 1 : vector<2x32xf32>, vector<2x32xf32> -> vector<2x64xf32>
    %cst_19 = arith.constant dense<0.000000e+00> : vector<2x64xf32>
    %64 = tpu.matmul %63, %14, %cst_19 {dimension_numbers = #tpu.dot_dimension_numbers<[1], [0], [0], [1], [0, 0, 1, 1], [], []>} : vector<2x64xf32>, vector<64x64xf32>, vector<2x64xf32> -> vector<2x64xf32>
    %65 = vector.broadcast %15 : vector<1x64xf32> to vector<2x64xf32>
    %66 = arith.addf %64, %65 : vector<2x64xf32>
    %67 = vector.extract_strided_slice %66 {offsets = [0, 0], sizes = [2, 32], strides = [1, 1]} : vector<2x64xf32> to vector<2x32xf32>
    %68 = arith.addf %67, %11 : vector<2x32xf32>
    %69 = math.tanh %68 : vector<2x32xf32>
    %70 = vector.extract_strided_slice %66 {offsets = [0, 32], sizes = [2, 32], strides = [1, 1]} : vector<2x64xf32> to vector<2x32xf32>
    %71 = math.tanh %70 : vector<2x32xf32>
    %72 = tpu.concatenate %69, %71 in 1 : vector<2x32xf32>, vector<2x32xf32> -> vector<2x64xf32>
    %cst_20 = arith.constant dense<0.000000e+00> : vector<2x64xf32>
    %73 = tpu.matmul %72, %14, %cst_20 {dimension_numbers = #tpu.dot_dimension_numbers<[1], [0], [0], [1], [0, 0, 1, 1], [], []>} : vector<2x64xf32>, vector<64x64xf32>, vector<2x64xf32> -> vector<2x64xf32>
    %74 = vector.broadcast %15 : vector<1x64xf32> to vector<2x64xf32>
    %75 = arith.addf %73, %74 : vector<2x64xf32>
    %76 = vector.extract_strided_slice %75 {offsets = [0, 0], sizes = [2, 32], strides = [1, 1]} : vector<2x64xf32> to vector<2x32xf32>
    %77 = arith.addf %76, %12 : vector<2x32xf32>
    %78 = math.tanh %77 : vector<2x32xf32>
    %79 = vector.extract_strided_slice %75 {offsets = [0, 32], sizes = [2, 32], strides = [1, 1]} : vector<2x64xf32> to vector<2x32xf32>
    %80 = math.tanh %79 : vector<2x32xf32>
    %81 = tpu.concatenate %78, %80 in 1 : vector<2x32xf32>, vector<2x32xf32> -> vector<2x64xf32>
    %cst_21 = arith.constant dense<0.000000e+00> : vector<2x64xf32>
    %82 = tpu.matmul %81, %14, %cst_21 {dimension_numbers = #tpu.dot_dimension_numbers<[1], [0], [0], [1], [0, 0, 1, 1], [], []>} : vector<2x64xf32>, vector<64x64xf32>, vector<2x64xf32> -> vector<2x64xf32>
    %83 = vector.broadcast %15 : vector<1x64xf32> to vector<2x64xf32>
    %84 = arith.addf %82, %83 : vector<2x64xf32>
    %85 = vector.extract_strided_slice %84 {offsets = [0, 0], sizes = [2, 32], strides = [1, 1]} : vector<2x64xf32> to vector<2x32xf32>
    %86 = arith.addf %85, %13 : vector<2x32xf32>
    %87 = math.tanh %86 : vector<2x32xf32>
    %88 = vector.extract_strided_slice %84 {offsets = [0, 32], sizes = [2, 32], strides = [1, 1]} : vector<2x64xf32> to vector<2x32xf32>
    %89 = math.tanh %88 : vector<2x32xf32>
    %90 = tpu.concatenate %87, %89 in 1 : vector<2x32xf32>, vector<2x32xf32> -> vector<2x64xf32>
    %cst_22 = arith.constant dense<0.000000e+00> : vector<2x64xf32>
    %91 = tpu.matmul %90, %14, %cst_22 {dimension_numbers = #tpu.dot_dimension_numbers<[1], [0], [0], [1], [0, 0, 1, 1], [], []>} : vector<2x64xf32>, vector<64x64xf32>, vector<2x64xf32> -> vector<2x64xf32>
    %92 = vector.broadcast %15 : vector<1x64xf32> to vector<2x64xf32>
    %93 = arith.addf %91, %92 : vector<2x64xf32>
    %94 = vector.extract_strided_slice %93 {offsets = [0, 32], sizes = [2, 32], strides = [1, 1]} : vector<2x64xf32> to vector<2x32xf32>
    %95 = math.tanh %94 : vector<2x32xf32>
    %c0_23 = arith.constant 0 : index
    %c0_24 = arith.constant 0 : index
    %c0_25 = arith.constant 0 : index
    %96 = vector.load %arg9[%c0_23, %c0_24, %c0_25] : memref<2x2x32xf32, #tpu.memory_space<vmem>>, vector<1x2x32xf32>
    %97 = vector.shape_cast %96 : vector<1x2x32xf32> to vector<2x32xf32>
    %98 = vector.shape_cast %87 : vector<2x32xf32> to vector<1x2x32xf32>
    tpu.vector_store %arg9[%c0_23, %c0_24, %c0_25], %98 {strides = array<i32>} : memref<2x2x32xf32, #tpu.memory_space<vmem>>, vector<1x2x32xf32>,
    %c1_26 = arith.constant 1 : index
    %c0_27 = arith.constant 0 : index
    %c0_28 = arith.constant 0 : index
    %99 = vector.load %arg9[%c1_26, %c0_27, %c0_28] : memref<2x2x32xf32, #tpu.memory_space<vmem>>, vector<1x2x32xf32>
    %100 = vector.shape_cast %99 : vector<1x2x32xf32> to vector<2x32xf32>
    %101 = vector.shape_cast %95 : vector<2x32xf32> to vector<1x2x32xf32>
    tpu.vector_store %arg9[%c1_26, %c0_27, %c0_28], %101 {strides = array<i32>} : memref<2x2x32xf32, #tpu.memory_space<vmem>>, vector<1x2x32xf32>,
    %102 = tpu.concatenate %35, %44, %53, %62, %71, %80, %89, %95 in 0 : vector<2x32xf32>, vector<2x32xf32>, vector<2x32xf32>, vector<2x32xf32>, vector<2x32xf32>, vector<2x32xf32>, vector<2x32xf32>, vector<2x32xf32> -> vector<16x32xf32>
    %c0_29 = arith.constant 0 : index
    %c0_30 = arith.constant 0 : index
    %103 = vector.load %arg6[%c0_29, %c0_30] : memref<32x16xf32, #tpu.memory_space<vmem>>, vector<32x16xf32>
    %cst_31 = arith.constant dense<0.000000e+00> : vector<16x16xf32>
    %104 = tpu.matmul %102, %103, %cst_31 {dimension_numbers = #tpu.dot_dimension_numbers<[1], [0], [0], [1], [0, 0, 1, 1], [], []>} : vector<16x32xf32>, vector<32x16xf32>, vector<16x16xf32> -> vector<16x16xf32>
    %c0_32 = arith.constant 0 : index
    %c0_33 = arith.constant 0 : index
    %105 = vector.load %arg7[%c0_32, %c0_33] : memref<1x16xf32, #tpu.memory_space<vmem>>, vector<1x16xf32>
    %106 = vector.broadcast %105 : vector<1x16xf32> to vector<16x16xf32>
    %107 = arith.addf %104, %106 : vector<16x16xf32>
    %c0_34 = arith.constant 0 : index
    %c0_35 = arith.constant 0 : index
    %108 = vector.load %arg8[%c0_34, %c0_35] : memref<16x16xf32, #tpu.memory_space<vmem>>, vector<16x16xf32>
    tpu.vector_store %arg8[%c0_34, %c0_35], %107 {strides = array<i32>} : memref<16x16xf32, #tpu.memory_space<vmem>>, vector<16x16xf32>,
    return
  }
}

</mosaic_0001>

<llo_original>
// kernel: char_rnn_forward.1
$region0: #{char_rnn_forward.1}
  #allocation0 [shape = 'u32[]', space=smem, size = 0x4, offset = 0x4, fixed_abs, tag = 'smem constant byte address 0x4 - core index']
  #allocation1 [shape = 'u32[144,128]{1,0:T(1,128)}', space=vmem, size = 0x12000, scoped, tag = 'internal scratch']
  %s0 = inlined_call_operand.vmem [shape: f32[16,16], index: 0, kind: input, shape index: {}]
  %s1 = inlined_call_operand.vmem [shape: f32[2,2,32], index: 1, kind: input, shape index: {}]
  %s2 = inlined_call_operand.vmem [shape: f32[64,64], index: 2, kind: input, shape index: {}]
  %s3 = inlined_call_operand.vmem [shape: f32[1,64], index: 3, kind: input, shape index: {}]
  %s4 = inlined_call_operand.vmem [shape: f32[16,32], index: 4, kind: input, shape index: {}]
  %s5 = inlined_call_operand.vmem [shape: f32[1,32], index: 5, kind: input, shape index: {}]
  %s6 = inlined_call_operand.vmem [shape: f32[32,16], index: 6, kind: input, shape index: {}]
  %s7 = inlined_call_operand.vmem [shape: f32[1,16], index: 7, kind: input, shape index: {}]
  %s8 = inlined_call_operand.vmem [shape: f32[16,16], index: 8, kind: output, shape index: {0}]
  %s9 = inlined_call_operand.hbm [shape: f32[2,2,32], index: 9, kind: output, shape index: {1}]
  %10 = xla_tuple %s8, %s9
  %s11 = sld [smem:[#allocation0]]
  $region50: #{char_rnn_forward.1} parent=0
    _
  %s13 = ssub.s32 1, %s11
  %s14 = scalar_select 0, %s13, %s11
  $region1: #{char_rnn_forward.1} parent=0
    #allocation2 [shape = 'u8[2048]{0}', space=vmem, size = 0x800, scoped, tag = 'output window, operand 1, single buffered']
    #allocation3 [shape = 's32[1]{0}', space=sflag, size = 0x4, scoped, tag = 'scoped memory for char_rnn_forward.1']
    %15 = vsyncpa [#allocation3], 0
    // Predicated region
    $region2: #{char_rnn_forward.1} parent=1 // pred_check
      _
    $region3: #{char_rnn_forward.1} parent=1 // pred_check_branch
      %17 = sbr.rel (0) target = $region5
    $region4: #{char_rnn_forward.1} parent=1 // pred_region
      _
    $region5: #{char_rnn_forward.1} parent=1 // pred_fallthru
      _
    // Predicated region
    $region6: #{char_rnn_forward.1} parent=1 // pred_check
      _
    $region7: #{char_rnn_forward.1} parent=1 // pred_check_branch
      %19 = sbr.rel (0) target = $region9
    $region8: #{char_rnn_forward.1} parent=1 // pred_region
      _
    $region9: #{char_rnn_forward.1} parent=1 // pred_fallthru
      _
    // Predicated region
    $region10: #{char_rnn_forward.1} parent=1 // pred_check
      _
    $region11: #{char_rnn_forward.1} parent=1 // pred_check_branch
      %21 = sbr.rel (0) target = $region13
    $region12: #{char_rnn_forward.1} parent=1 // pred_region
      _
    $region13: #{char_rnn_forward.1} parent=1 // pred_fallthru
      _
    // Predicated region
    $region14: #{char_rnn_forward.1} parent=1 // pred_check
      _
    $region15: #{char_rnn_forward.1} parent=1 // pred_check_branch
      %23 = sbr.rel (0) target = $region17
    $region16: #{char_rnn_forward.1} parent=1 // pred_region
      _
    $region17: #{char_rnn_forward.1} parent=1 // pred_fallthru
      _
    // Predicated region
    $region18: #{char_rnn_forward.1} parent=1 // pred_check
      _
    $region19: #{char_rnn_forward.1} parent=1 // pred_check_branch
      %25 = sbr.rel (0) target = $region21
    $region20: #{char_rnn_forward.1} parent=1 // pred_region
      _
    $region21: #{char_rnn_forward.1} parent=1 // pred_fallthru
      _
    // Predicated region
    $region22: #{char_rnn_forward.1} parent=1 // pred_check
      _
    $region23: #{char_rnn_forward.1} parent=1 // pred_check_branch
      %27 = sbr.rel (0) target = $region25
    $region24: #{char_rnn_forward.1} parent=1 // pred_region
      _
    $region25: #{char_rnn_forward.1} parent=1 // pred_fallthru
      _
    // Predicated region
    $region26: #{char_rnn_forward.1} parent=1 // pred_check
      _
    $region27: #{char_rnn_forward.1} parent=1 // pred_check_branch
      %29 = sbr.rel (0) target = $region29
    $region28: #{char_rnn_forward.1} parent=1 // pred_region
      _
    $region29: #{char_rnn_forward.1} parent=1 // pred_fallthru
      _
    // Predicated region
    $region30: #{char_rnn_forward.1} parent=1 // pred_check
      _
    $region31: #{char_rnn_forward.1} parent=1 // pred_check_branch
      %31 = sbr.rel (0) target = $region33
    $region32: #{char_rnn_forward.1} parent=1 // pred_region
      _
    $region33: #{char_rnn_forward.1} parent=1 // pred_fallthru
      _
    %v32 = vld [vmem:[%s0] sm:$0xff]
    %v33 = vld [vmem:[%s0 + $0x8] sm:$0xff]
    %v34 = vld [vmem:[%s4] sm:$0xff]
    %v35 = vld [vmem:[%s4 + $0x8] sm:$0xff]
    %v36 = vld [vmem:[%s5] sm:$0x1]
    %v38 = vlaneseq
    %v39 = vshrl.u32 %v38, 7
    %v40 = vsub.s32 0, %v39
    %v41 = vrot.slane %v36, %v40
    %vm43 = vcmask 130048
    %v45 = vsel %vm43, %v32, 0
    %v48 = vsel %vm43, %v33, 0
    %50 = vmatprep.subr.mxu0 0.0
    %51 = vmatpush1.msra.mxu0 %v34
    %52 = vmatprep.subr.mxu0 0.0
    %53 = vmatpush1.msra.mxu0 %v35
    %54 = vmatprep.subr.mxu0 0.0
    %55 = vmatpush1.msra.mxu0 0.0
    %56 = vmatprep.subr.mxu0 0.0
    %57 = vmatpush1.msra.mxu0 0.0
    %58 = vmatprep.subr.mxu0 0.0
    %59 = vmatpush1.msra.mxu0 0.0
    %60 = vmatprep.subr.mxu0 0.0
    %61 = vmatpush1.msra.mxu0 0.0
    %62 = vmatprep.subr.mxu0 0.0
    %63 = vmatpush1.msra.mxu0 0.0
    %64 = vmatprep.subr.mxu0 0.0
    %65 = vmatpush1.msra.mxu0 0.0
    %66 = vmatprep.subr.mxu0 0.0
    %67 = vmatpush1.msra.mxu0 0.0
    %68 = vmatprep.subr.mxu0 0.0
    %69 = vmatpush1.msra.mxu0 0.0
    %70 = vmatprep.subr.mxu0 0.0
    %71 = vmatpush1.msra.mxu0 0.0
    %72 = vmatprep.subr.mxu0 0.0
    %73 = vmatpush1.msra.mxu0 0.0
    %74 = vmatprep.subr.mxu0 0.0
    %75 = vmatpush1.msra.mxu0 0.0
    %76 = vmatprep.subr.mxu0 0.0
    %77 = vmatpush1.msra.mxu0 0.0
    %78 = vmatprep.subr.mxu0 0.0
    %79 = vmatpush1.msra.mxu0 0.0
    %80 = vmatprep.subr.mxu0 0.0
    %81 = vmatpush1.msra.mxu0 0.0
    %82 = vmatprep.subr.mxu0 0.0
    %83 = vmatpush1.msra.mxu0 0.0
    %84 = vmatprep.subr.mxu0 0.0
    %85 = vmatpush1.msra.mxu0 0.0
    %86 = vmatprep.subr.mxu0 0.0
    %87 = vmatpush1.msra.mxu0 0.0
    %88 = vmatprep.subr.mxu0 0.0
    %89 = vmatpush1.msra.mxu0 0.0
    %90 = vmatprep.subr.mxu0 0.0
    %91 = vmatpush1.msra.mxu0 0.0
    %92 = vmatprep.subr.mxu0 0.0
    %93 = vmatpush1.msra.mxu0 0.0
    %94 = vmatprep.subr.mxu0 0.0
    %95 = vmatpush1.msra.mxu0 0.0
    %96 = vmatprep.subr.mxu0 0.0
    %97 = vmatpush1.msra.mxu0 0.0
    %98 = vmatprep.subr.mxu0 0.0
    %99 = vmatpush1.msra.mxu0 0.0
    %100 = vmatprep.subr.mxu0 0.0
    %101 = vmatpush1.msra.mxu0 0.0
    %102 = vmatprep.subr.mxu0 0.0
    %103 = vmatpush1.msra.mxu0 0.0
    %104 = vmatprep.subr.mxu0 0.0
    %105 = vmatpush1.msra.mxu0 0.0
    %106 = vmatprep.subr.mxu0 0.0
    %107 = vmatpush1.msra.mxu0 0.0
    %108 = vmatprep.subr.mxu0 0.0
    %109 = vmatpush1.msra.mxu0 0.0
    %110 = vmatprep.subr.mxu0 0.0
    %111 = vmatpush1.msra.mxu0 0.0
    %112 = vmatprep.subr.mxu0 0.0
    %113 = vmatpush1.msra.mxu0 0.0
    %114 = vmatprep.mubr.f32.mxu0 0.0
    %115 = vmatmul.mubr.f32.gmra.mrb[0].mxu0 %v45
    %v116 = vpop.f32.mrb[0].mxu0
    %v117 = vadd.f32 %v41, %v116
    %v118 = vpop.f32.mrb[0].mxu0
    %119 = vmatprep.mubr.f32.mxu0 0.0
    %120 = vmatmul.mubr.f32.gmra.mrb[0].mxu0 %v48
    %v121 = vpop.f32.mrb[0].mxu0
    %v122 = vadd.f32 %v41, %v121
    %v123 = vpop.f32.mrb[0].mxu0
    %124 = vdwg.mxu0
    %v125 = vld [vmem:[%s2] sm:$0xff]
    %v126 = vld [vmem:[%s2 + $0x8] sm:$0xff]
    %v127 = vld [vmem:[%s2 + $0x10] sm:$0xff]
    %v128 = vld [vmem:[%s2 + $0x18] sm:$0xff]
    %v129 = vld [vmem:[%s2 + $0x20] sm:$0xff]
    %v130 = vld [vmem:[%s2 + $0x28] sm:$0xff]
    %v131 = vld [vmem:[%s2 + $0x30] sm:$0xff]
    %v132 = vld [vmem:[%s2 + $0x38] sm:$0xff]
    %v133 = vld [vmem:[%s3] sm:$0x1]
    %v134 = vld [vmem:[%s1] sm:$0x3]
    %s135 = scalar_lea.vmem %s1, 2
    %v136 = vld [vmem:[%s135] sm:$0x3]
    %138 = vrot.lane.b32.xlu0 %v136, 32
    %v139 = vpop.permute.xlu0 %138
    %vm141 = vcmask 261120
    %v142 = vsel %vm141, %v134, %v139
    %v144 = vlaneseq
    %v145 = vshrl.u32 %v144, 7
    %v146 = vsub.s32 0, %v145
    %v147 = vrot.slane %v133, %v146
    %vm149 = vcmask 523264
    %v151 = vsel %vm149, %v142, 0
    %153 = vmatprep.subr.mxu0 0.0
    %154 = vmatpush1.msra.mxu0 %v125
    %155 = vmatprep.subr.mxu0 0.0
    %156 = vmatpush1.msra.mxu0 %v126
    %157 = vmatprep.subr.mxu0 0.0
    %158 = vmatpush1.msra.mxu0 %v127
    %159 = vmatprep.subr.mxu0 0.0
    %160 = vmatpush1.msra.mxu0 %v128
    %161 = vmatprep.subr.mxu0 0.0
    %162 = vmatpush1.msra.mxu0 %v129
    %163 = vmatprep.subr.mxu0 0.0
    %164 = vmatpush1.msra.mxu0 %v130
    %165 = vmatprep.subr.mxu0 0.0
    %166 = vmatpush1.msra.mxu0 %v131
    %167 = vmatprep.subr.mxu0 0.0
    %168 = vmatpush1.msra.mxu0 %v132
    %169 = vmatprep.subr.mxu0 0.0
    %170 = vmatpush1.msra.mxu0 0.0
    %171 = vmatprep.subr.mxu0 0.0
    %172 = vmatpush1.msra.mxu0 0.0
    %173 = vmatprep.subr.mxu0 0.0
    %174 = vmatpush1.msra.mxu0 0.0
    %175 = vmatprep.subr.mxu0 0.0
    %176 = vmatpush1.msra.mxu0 0.0
    %177 = vmatprep.subr.mxu0 0.0
    %178 = vmatpush1.msra.mxu0 0.0
    %179 = vmatprep.subr.mxu0 0.0
    %180 = vmatpush1.msra.mxu0 0.0
    %181 = vmatprep.subr.mxu0 0.0
    %182 = vmatpush1.msra.mxu0 0.0
    %183 = vmatprep.subr.mxu0 0.0
    %184 = vmatpush1.msra.mxu0 0.0
    %185 = vmatprep.subr.mxu0 0.0
    %186 = vmatpush1.msra.mxu0 0.0
    %187 = vmatprep.subr.mxu0 0.0
    %188 = vmatpush1.msra.mxu0 0.0
    %189 = vmatprep.subr.mxu0 0.0
    %190 = vmatpush1.msra.mxu0 0.0
    %191 = vmatprep.subr.mxu0 0.0
    %192 = vmatpush1.msra.mxu0 0.0
    %193 = vmatprep.subr.mxu0 0.0
    %194 = vmatpush1.msra.mxu0 0.0
    %195 = vmatprep.subr.mxu0 0.0
    %196 = vmatpush1.msra.mxu0 0.0
    %197 = vmatprep.subr.mxu0 0.0
    %198 = vmatpush1.msra.mxu0 0.0
    %199 = vmatprep.subr.mxu0 0.0
    %200 = vmatpush1.msra.mxu0 0.0
    %201 = vmatprep.subr.mxu0 0.0
    %202 = vmatpush1.msra.mxu0 0.0
    %203 = vmatprep.subr.mxu0 0.0
    %204 = vmatpush1.msra.mxu0 0.0
    %205 = vmatprep.subr.mxu0 0.0
    %206 = vmatpush1.msra.mxu0 0.0
    %207 = vmatprep.subr.mxu0 0.0
    %208 = vmatpush1.msra.mxu0 0.0
    %209 = vmatprep.subr.mxu0 0.0
    %210 = vmatpush1.msra.mxu0 0.0
    %211 = vmatprep.subr.mxu0 0.0
    %212 = vmatpush1.msra.mxu0 0.0
    %213 = vmatprep.subr.mxu0 0.0
    %214 = vmatpush1.msra.mxu0 0.0
    %215 = vmatprep.subr.mxu0 0.0
    %216 = vmatpush1.msra.mxu0 0.0
    %217 = vmatprep.mubr.f32.mxu0 0.0
    %218 = vmatmul.mubr.f32.gmra.mrb[0].mxu0 %v151
    %v219 = vpop.f32.mrb[0].mxu0
    %v220 = vadd.f32 %v147, %v219
    %v221 = vpop.f32.mrb[0].mxu0
    %222 = vdwg.mxu0
    %v223 = vadd.f32 %v220, %v117
    %v224 = vtanh.pop %v223
    %v225 = vsel %vm141, %v224, %v139
    %v227 = vsel %vm149, %v225, 0
    %229 = vmatprep.subr.mxu0 0.0
    %230 = vmatpush1.msra.mxu0 %v125
    %231 = vmatprep.subr.mxu0 0.0
    %232 = vmatpush1.msra.mxu0 %v126
    %233 = vmatprep.subr.mxu0 0.0
    %234 = vmatpush1.msra.mxu0 %v127
    %235 = vmatprep.subr.mxu0 0.0
    %236 = vmatpush1.msra.mxu0 %v128
    %237 = vmatprep.subr.mxu0 0.0
    %238 = vmatpush1.msra.mxu0 %v129
    %239 = vmatprep.subr.mxu0 0.0
    %240 = vmatpush1.msra.mxu0 %v130
    %241 = vmatprep.subr.mxu0 0.0
    %242 = vmatpush1.msra.mxu0 %v131
    %243 = vmatprep.subr.mxu0 0.0
    %244 = vmatpush1.msra.mxu0 %v132
    %245 = vmatprep.subr.mxu0 0.0
    %246 = vmatpush1.msra.mxu0 0.0
    %247 = vmatprep.subr.mxu0 0.0
    %248 = vmatpush1.msra.mxu0 0.0
    %249 = vmatprep.subr.mxu0 0.0
    %250 = vmatpush1.msra.mxu0 0.0
    %251 = vmatprep.subr.mxu0 0.0
    %252 = vmatpush1.msra.mxu0 0.0
    %253 = vmatprep.subr.mxu0 0.0
    %254 = vmatpush1.msra.mxu0 0.0
    %255 = vmatprep.subr.mxu0 0.0
    %256 = vmatpush1.msra.mxu0 0.0
    %257 = vmatprep.subr.mxu0 0.0
    %258 = vmatpush1.msra.mxu0 0.0
    %259 = vmatprep.subr.mxu0 0.0
    %260 = vmatpush1.msra.mxu0 0.0
    %261 = vmatprep.subr.mxu0 0.0
    %262 = vmatpush1.msra.mxu0 0.0
    %263 = vmatprep.subr.mxu0 0.0
    %264 = vmatpush1.msra.mxu0 0.0
    %265 = vmatprep.subr.mxu0 0.0
    %266 = vmatpush1.msra.mxu0 0.0
    %267 = vmatprep.subr.mxu0 0.0
    %268 = vmatpush1.msra.mxu0 0.0
    %269 = vmatprep.subr.mxu0 0.0
    %270 = vmatpush1.msra.mxu0 0.0
    %271 = vmatprep.subr.mxu0 0.0
    %272 = vmatpush1.msra.mxu0 0.0
    %273 = vmatprep.subr.mxu0 0.0
    %274 = vmatpush1.msra.mxu0 0.0
    %275 = vmatprep.subr.mxu0 0.0
    %276 = vmatpush1.msra.mxu0 0.0
    %277 = vmatprep.subr.mxu0 0.0
    %278 = vmatpush1.msra.mxu0 0.0
    %279 = vmatprep.subr.mxu0 0.0
    %280 = vmatpush1.msra.mxu0 0.0
    %281 = vmatprep.subr.mxu0 0.0
    %282 = vmatpush1.msra.mxu0 0.0
    %283 = vmatprep.subr.mxu0 0.0
    %284 = vmatpush1.msra.mxu0 0.0
    %285 = vmatprep.subr.mxu0 0.0
    %286 = vmatpush1.msra.mxu0 0.0
    %287 = vmatprep.subr.mxu0 0.0
    %288 = vmatpush1.msra.mxu0 0.0
    %289 = vmatprep.subr.mxu0 0.0
    %290 = vmatpush1.msra.mxu0 0.0
    %291 = vmatprep.subr.mxu0 0.0
    %292 = vmatpush1.msra.mxu0 0.0
    %293 = vmatprep.mubr.f32.mxu0 0.0
    %294 = vmatmul.mubr.f32.gmra.mrb[0].mxu0 %v227
    %v295 = vpop.f32.mrb[0].mxu0
    %v296 = vadd.f32 %v147, %v295
    %v297 = vpop.f32.mrb[0].mxu0
    %298 = vdwg.mxu0
    %v300 = vrot.slane %v117, 2
    %v302 = vadd.f32 %v296, %v300
    %v303 = vtanh.pop %v302
    %v304 = vtanh.pop %v296
    %v305 = vsel %vm141, %v303, %v304
    %v307 = vsel %vm149, %v305, 0
    %309 = vmatprep.subr.mxu0 0.0
    %310 = vmatpush1.msra.mxu0 %v125
    %311 = vmatprep.subr.mxu0 0.0
    %312 = vmatpush1.msra.mxu0 %v126
    %313 = vmatprep.subr.mxu0 0.0
    %314 = vmatpush1.msra.mxu0 %v127
    %315 = vmatprep.subr.mxu0 0.0
    %316 = vmatpush1.msra.mxu0 %v128
    %317 = vmatprep.subr.mxu0 0.0
    %318 = vmatpush1.msra.mxu0 %v129
    %319 = vmatprep.subr.mxu0 0.0
    %320 = vmatpush1.msra.mxu0 %v130
    %321 = vmatprep.subr.mxu0 0.0
    %322 = vmatpush1.msra.mxu0 %v131
    %323 = vmatprep.subr.mxu0 0.0
    %324 = vmatpush1.msra.mxu0 %v132
    %325 = vmatprep.subr.mxu0 0.0
    %326 = vmatpush1.msra.mxu0 0.0
    %327 = vmatprep.subr.mxu0 0.0
    %328 = vmatpush1.msra.mxu0 0.0
    %329 = vmatprep.subr.mxu0 0.0
    %330 = vmatpush1.msra.mxu0 0.0
    %331 = vmatprep.subr.mxu0 0.0
    %332 = vmatpush1.msra.mxu0 0.0
    %333 = vmatprep.subr.mxu0 0.0
    %334 = vmatpush1.msra.mxu0 0.0
    %335 = vmatprep.subr.mxu0 0.0
    %336 = vmatpush1.msra.mxu0 0.0
    %337 = vmatprep.subr.mxu0 0.0
    %338 = vmatpush1.msra.mxu0 0.0
    %339 = vmatprep.subr.mxu0 0.0
    %340 = vmatpush1.msra.mxu0 0.0
    %341 = vmatprep.subr.mxu0 0.0
    %342 = vmatpush1.msra.mxu0 0.0
    %343 = vmatprep.subr.mxu0 0.0
    %344 = vmatpush1.msra.mxu0 0.0
    %345 = vmatprep.subr.mxu0 0.0
    %346 = vmatpush1.msra.mxu0 0.0
    %347 = vmatprep.subr.mxu0 0.0
    %348 = vmatpush1.msra.mxu0 0.0
    %349 = vmatprep.subr.mxu0 0.0
    %350 = vmatpush1.msra.mxu0 0.0
    %351 = vmatprep.subr.mxu0 0.0
    %352 = vmatpush1.msra.mxu0 0.0
    %353 = vmatprep.subr.mxu0 0.0
    %354 = vmatpush1.msra.mxu0 0.0
    %355 = vmatprep.subr.mxu0 0.0
    %356 = vmatpush1.msra.mxu0 0.0
    %357 = vmatprep.subr.mxu0 0.0
    %358 = vmatpush1.msra.mxu0 0.0
    %359 = vmatprep.subr.mxu0 0.0
    %360 = vmatpush1.msra.mxu0 0.0
    %361 = vmatprep.subr.mxu0 0.0
    %362 = vmatpush1.msra.mxu0 0.0
    %363 = vmatprep.subr.mxu0 0.0
    %364 = vmatpush1.msra.mxu0 0.0
    %365 = vmatprep.subr.mxu0 0.0
    %366 = vmatpush1.msra.mxu0 0.0
    %367 = vmatprep.subr.mxu0 0.0
    %368 = vmatpush1.msra.mxu0 0.0
    %369 = vmatprep.subr.mxu0 0.0
    %370 = vmatpush1.msra.mxu0 0.0
    %371 = vmatprep.subr.mxu0 0.0
    %372 = vmatpush1.msra.mxu0 0.0
    %373 = vmatprep.mubr.f32.mxu0 0.0
    %374 = vmatmul.mubr.f32.gmra.mrb[0].mxu0 %v307
    %v375 = vpop.f32.mrb[0].mxu0
    %v376 = vadd.f32 %v147, %v375
    %v377 = vpop.f32.mrb[0].mxu0
    %378 = vdwg.mxu0
    %v379 = vrot.slane %v117, 4
    %v381 = vadd.f32 %v376, %v379
    %v382 = vtanh.pop %v381
    %v383 = vtanh.pop %v376
    %v384 = vsel %vm141, %v382, %v383
    %v386 = vsel %vm149, %v384, 0
    %388 = vmatprep.subr.mxu0 0.0
    %389 = vmatpush1.msra.mxu0 %v125
    %390 = vmatprep.subr.mxu0 0.0
    %391 = vmatpush1.msra.mxu0 %v126
    %392 = vmatprep.subr.mxu0 0.0
    %393 = vmatpush1.msra.mxu0 %v127
    %394 = vmatprep.subr.mxu0 0.0
    %395 = vmatpush1.msra.mxu0 %v128
    %396 = vmatprep.subr.mxu0 0.0
    %397 = vmatpush1.msra.mxu0 %v129
    %398 = vmatprep.subr.mxu0 0.0
    %399 = vmatpush1.msra.mxu0 %v130
    %400 = vmatprep.subr.mxu0 0.0
    %401 = vmatpush1.msra.mxu0 %v131
    %402 = vmatprep.subr.mxu0 0.0
    %403 = vmatpush1.msra.mxu0 %v132
    %404 = vmatprep.subr.mxu0 0.0
    %405 = vmatpush1.msra.mxu0 0.0
    %406 = vmatprep.subr.mxu0 0.0
    %407 = vmatpush1.msra.mxu0 0.0
    %408 = vmatprep.subr.mxu0 0.0
    %409 = vmatpush1.msra.mxu0 0.0
    %410 = vmatprep.subr.mxu0 0.0
    %411 = vmatpush1.msra.mxu0 0.0
    %412 = vmatprep.subr.mxu0 0.0
    %413 = vmatpush1.msra.mxu0 0.0
    %414 = vmatprep.subr.mxu0 0.0
    %415 = vmatpush1.msra.mxu0 0.0
    %416 = vmatprep.subr.mxu0 0.0
    %417 = vmatpush1.msra.mxu0 0.0
    %418 = vmatprep.subr.mxu0 0.0
    %419 = vmatpush1.msra.mxu0 0.0
    %420 = vmatprep.subr.mxu0 0.0
    %421 = vmatpush1.msra.mxu0 0.0
    %422 = vmatprep.subr.mxu0 0.0
    %423 = vmatpush1.msra.mxu0 0.0
    %424 = vmatprep.subr.mxu0 0.0
    %425 = vmatpush1.msra.mxu0 0.0
    %426 = vmatprep.subr.mxu0 0.0
    %427 = vmatpush1.msra.mxu0 0.0
    %428 = vmatprep.subr.mxu0 0.0
    %429 = vmatpush1.msra.mxu0 0.0
    %430 = vmatprep.subr.mxu0 0.0
    %431 = vmatpush1.msra.mxu0 0.0
    %432 = vmatprep.subr.mxu0 0.0
    %433 = vmatpush1.msra.mxu0 0.0
    %434 = vmatprep.subr.mxu0 0.0
    %435 = vmatpush1.msra.mxu0 0.0
    %436 = vmatprep.subr.mxu0 0.0
    %437 = vmatpush1.msra.mxu0 0.0
    %438 = vmatprep.subr.mxu0 0.0
    %439 = vmatpush1.msra.mxu0 0.0
    %440 = vmatprep.subr.mxu0 0.0
    %441 = vmatpush1.msra.mxu0 0.0
    %442 = vmatprep.subr.mxu0 0.0
    %443 = vmatpush1.msra.mxu0 0.0
    %444 = vmatprep.subr.mxu0 0.0
    %445 = vmatpush1.msra.mxu0 0.0
    %446 = vmatprep.subr.mxu0 0.0
    %447 = vmatpush1.msra.mxu0 0.0
    %448 = vmatprep.subr.mxu0 0.0
    %449 = vmatpush1.msra.mxu0 0.0
    %450 = vmatprep.subr.mxu0 0.0
    %451 = vmatpush1.msra.mxu0 0.0
    %452 = vmatprep.mubr.f32.mxu0 0.0
    %453 = vmatmul.mubr.f32.gmra.mrb[0].mxu0 %v386
    %v454 = vpop.f32.mrb[0].mxu0
    %v455 = vadd.f32 %v147, %v454
    %v456 = vpop.f32.mrb[0].mxu0
    %457 = vdwg.mxu0
    %v458 = vrot.slane %v117, 6
    %v460 = vadd.f32 %v455, %v458
    %v461 = vtanh.pop %v460
    %v462 = vtanh.pop %v455
    %v463 = vsel %vm141, %v461, %v462
    %v465 = vsel %vm149, %v463, 0
    %467 = vmatprep.subr.mxu0 0.0
    %468 = vmatpush1.msra.mxu0 %v125
    %469 = vmatprep.subr.mxu0 0.0
    %470 = vmatpush1.msra.mxu0 %v126
    %471 = vmatprep.subr.mxu0 0.0
    %472 = vmatpush1.msra.mxu0 %v127
    %473 = vmatprep.subr.mxu0 0.0
    %474 = vmatpush1.msra.mxu0 %v128
    %475 = vmatprep.subr.mxu0 0.0
    %476 = vmatpush1.msra.mxu0 %v129
    %477 = vmatprep.subr.mxu0 0.0
    %478 = vmatpush1.msra.mxu0 %v130
    %479 = vmatprep.subr.mxu0 0.0
    %480 = vmatpush1.msra.mxu0 %v131
    %481 = vmatprep.subr.mxu0 0.0
    %482 = vmatpush1.msra.mxu0 %v132
    %483 = vmatprep.subr.mxu0 0.0
    %484 = vmatpush1.msra.mxu0 0.0
    %485 = vmatprep.subr.mxu0 0.0
    %486 = vmatpush1.msra.mxu0 0.0
    %487 = vmatprep.subr.mxu0 0.0
    %488 = vmatpush1.msra.mxu0 0.0
    %489 = vmatprep.subr.mxu0 0.0
    %490 = vmatpush1.msra.mxu0 0.0
    %491 = vmatprep.subr.mxu0 0.0
    %492 = vmatpush1.msra.mxu0 0.0
    %493 = vmatprep.subr.mxu0 0.0
    %494 = vmatpush1.msra.mxu0 0.0
    %495 = vmatprep.subr.mxu0 0.0
    %496 = vmatpush1.msra.mxu0 0.0
    %497 = vmatprep.subr.mxu0 0.0
    %498 = vmatpush1.msra.mxu0 0.0
    %499 = vmatprep.subr.mxu0 0.0
    %500 = vmatpush1.msra.mxu0 0.0
    %501 = vmatprep.subr.mxu0 0.0
    %502 = vmatpush1.msra.mxu0 0.0
    %503 = vmatprep.subr.mxu0 0.0
    %504 = vmatpush1.msra.mxu0 0.0
    %505 = vmatprep.subr.mxu0 0.0
    %506 = vmatpush1.msra.mxu0 0.0
    %507 = vmatprep.subr.mxu0 0.0
    %508 = vmatpush1.msra.mxu0 0.0
    %509 = vmatprep.subr.mxu0 0.0
    %510 = vmatpush1.msra.mxu0 0.0
    %511 = vmatprep.subr.mxu0 0.0
    %512 = vmatpush1.msra.mxu0 0.0
    %513 = vmatprep.subr.mxu0 0.0
    %514 = vmatpush1.msra.mxu0 0.0
    %515 = vmatprep.subr.mxu0 0.0
    %516 = vmatpush1.msra.mxu0 0.0
    %517 = vmatprep.subr.mxu0 0.0
    %518 = vmatpush1.msra.mxu0 0.0
    %519 = vmatprep.subr.mxu0 0.0
    %520 = vmatpush1.msra.mxu0 0.0
    %521 = vmatprep.subr.mxu0 0.0
    %522 = vmatpush1.msra.mxu0 0.0
    %523 = vmatprep.subr.mxu0 0.0
    %524 = vmatpush1.msra.mxu0 0.0
    %525 = vmatprep.subr.mxu0 0.0
    %526 = vmatpush1.msra.mxu0 0.0
    %527 = vmatprep.subr.mxu0 0.0
    %528 = vmatpush1.msra.mxu0 0.0
    %529 = vmatprep.subr.mxu0 0.0
    %530 = vmatpush1.msra.mxu0 0.0
    %531 = vmatprep.mubr.f32.mxu0 0.0
    %532 = vmatmul.mubr.f32.gmra.mrb[0].mxu0 %v465
    %v533 = vpop.f32.mrb[0].mxu0
    %v534 = vadd.f32 %v147, %v533
    %v535 = vpop.f32.mrb[0].mxu0
    %536 = vdwg.mxu0
    %v537 = vadd.f32 %v534, %v122
    %v538 = vtanh.pop %v537
    %v539 = vtanh.pop %v534
    %v540 = vsel %vm141, %v538, %v539
    %v542 = vsel %vm149, %v540, 0
    %544 = vmatprep.subr.mxu0 0.0
    %545 = vmatpush1.msra.mxu0 %v125
    %546 = vmatprep.subr.mxu0 0.0
    %547 = vmatpush1.msra.mxu0 %v126
    %548 = vmatprep.subr.mxu0 0.0
    %549 = vmatpush1.msra.mxu0 %v127
    %550 = vmatprep.subr.mxu0 0.0
    %551 = vmatpush1.msra.mxu0 %v128
    %552 = vmatprep.subr.mxu0 0.0
    %553 = vmatpush1.msra.mxu0 %v129
    %554 = vmatprep.subr.mxu0 0.0
    %555 = vmatpush1.msra.mxu0 %v130
    %556 = vmatprep.subr.mxu0 0.0
    %557 = vmatpush1.msra.mxu0 %v131
    %558 = vmatprep.subr.mxu0 0.0
    %559 = vmatpush1.msra.mxu0 %v132
    %560 = vmatprep.subr.mxu0 0.0
    %561 = vmatpush1.msra.mxu0 0.0
    %562 = vmatprep.subr.mxu0 0.0
    %563 = vmatpush1.msra.mxu0 0.0
    %564 = vmatprep.subr.mxu0 0.0
    %565 = vmatpush1.msra.mxu0 0.0
    %566 = vmatprep.subr.mxu0 0.0
    %567 = vmatpush1.msra.mxu0 0.0
    %568 = vmatprep.subr.mxu0 0.0
    %569 = vmatpush1.msra.mxu0 0.0
    %570 = vmatprep.subr.mxu0 0.0
    %571 = vmatpush1.msra.mxu0 0.0
    %572 = vmatprep.subr.mxu0 0.0
    %573 = vmatpush1.msra.mxu0 0.0
    %574 = vmatprep.subr.mxu0 0.0
    %575 = vmatpush1.msra.mxu0 0.0
    %576 = vmatprep.subr.mxu0 0.0
    %577 = vmatpush1.msra.mxu0 0.0
    %578 = vmatprep.subr.mxu0 0.0
    %579 = vmatpush1.msra.mxu0 0.0
    %580 = vmatprep.subr.mxu0 0.0
    %581 = vmatpush1.msra.mxu0 0.0
    %582 = vmatprep.subr.mxu0 0.0
    %583 = vmatpush1.msra.mxu0 0.0
    %584 = vmatprep.subr.mxu0 0.0
    %585 = vmatpush1.msra.mxu0 0.0
    %586 = vmatprep.subr.mxu0 0.0
    %587 = vmatpush1.msra.mxu0 0.0
    %588 = vmatprep.subr.mxu0 0.0
    %589 = vmatpush1.msra.mxu0 0.0
    %590 = vmatprep.subr.mxu0 0.0
    %591 = vmatpush1.msra.mxu0 0.0
    %592 = vmatprep.subr.mxu0 0.0
    %593 = vmatpush1.msra.mxu0 0.0
    %594 = vmatprep.subr.mxu0 0.0
    %595 = vmatpush1.msra.mxu0 0.0
    %596 = vmatprep.subr.mxu0 0.0
    %597 = vmatpush1.msra.mxu0 0.0
    %598 = vmatprep.subr.mxu0 0.0
    %599 = vmatpush1.msra.mxu0 0.0
    %600 = vmatprep.subr.mxu0 0.0
    %601 = vmatpush1.msra.mxu0 0.0
    %602 = vmatprep.subr.mxu0 0.0
    %603 = vmatpush1.msra.mxu0 0.0
    %604 = vmatprep.subr.mxu0 0.0
    %605 = vmatpush1.msra.mxu0 0.0
    %606 = vmatprep.subr.mxu0 0.0
    %607 = vmatpush1.msra.mxu0 0.0
    %608 = vmatprep.mubr.f32.mxu0 0.0
    %609 = vmatmul.mubr.f32.gmra.mrb[0].mxu0 %v542
    %v610 = vpop.f32.mrb[0].mxu0
    %v611 = vadd.f32 %v147, %v610
    %v612 = vpop.f32.mrb[0].mxu0
    %613 = vdwg.mxu0
    %v615 = vrot.slane %v122, 2
    %v617 = vadd.f32 %v611, %v615
    %v618 = vtanh.pop %v617
    %v619 = vtanh.pop %v611
    %v620 = vsel %vm141, %v618, %v619
    %v622 = vsel %vm149, %v620, 0
    %624 = vmatprep.subr.mxu0 0.0
    %625 = vmatpush1.msra.mxu0 %v125
    %626 = vmatprep.subr.mxu0 0.0
    %627 = vmatpush1.msra.mxu0 %v126
    %628 = vmatprep.subr.mxu0 0.0
    %629 = vmatpush1.msra.mxu0 %v127
    %630 = vmatprep.subr.mxu0 0.0
    %631 = vmatpush1.msra.mxu0 %v128
    %632 = vmatprep.subr.mxu0 0.0
    %633 = vmatpush1.msra.mxu0 %v129
    %634 = vmatprep.subr.mxu0 0.0
    %635 = vmatpush1.msra.mxu0 %v130
    %636 = vmatprep.subr.mxu0 0.0
    %637 = vmatpush1.msra.mxu0 %v131
    %638 = vmatprep.subr.mxu0 0.0
    %639 = vmatpush1.msra.mxu0 %v132
    %640 = vmatprep.subr.mxu0 0.0
    %641 = vmatpush1.msra.mxu0 0.0
    %642 = vmatprep.subr.mxu0 0.0
    %643 = vmatpush1.msra.mxu0 0.0
    %644 = vmatprep.subr.mxu0 0.0
    %645 = vmatpush1.msra.mxu0 0.0
    %646 = vmatprep.subr.mxu0 0.0
    %647 = vmatpush1.msra.mxu0 0.0
    %648 = vmatprep.subr.mxu0 0.0
    %649 = vmatpush1.msra.mxu0 0.0
    %650 = vmatprep.subr.mxu0 0.0
    %651 = vmatpush1.msra.mxu0 0.0
    %652 = vmatprep.subr.mxu0 0.0
    %653 = vmatpush1.msra.mxu0 0.0
    %654 = vmatprep.subr.mxu0 0.0
    %655 = vmatpush1.msra.mxu0 0.0
    %656 = vmatprep.subr.mxu0 0.0
    %657 = vmatpush1.msra.mxu0 0.0
    %658 = vmatprep.subr.mxu0 0.0
    %659 = vmatpush1.msra.mxu0 0.0
    %660 = vmatprep.subr.mxu0 0.0
    %661 = vmatpush1.msra.mxu0 0.0
    %662 = vmatprep.subr.mxu0 0.0
    %663 = vmatpush1.msra.mxu0 0.0
    %664 = vmatprep.subr.mxu0 0.0
    %665 = vmatpush1.msra.mxu0 0.0
    %666 = vmatprep.subr.mxu0 0.0
    %667 = vmatpush1.msra.mxu0 0.0
    %668 = vmatprep.subr.mxu0 0.0
    %669 = vmatpush1.msra.mxu0 0.0
    %670 = vmatprep.subr.mxu0 0.0
    %671 = vmatpush1.msra.mxu0 0.0
    %672 = vmatprep.subr.mxu0 0.0
    %673 = vmatpush1.msra.mxu0 0.0
    %674 = vmatprep.subr.mxu0 0.0
    %675 = vmatpush1.msra.mxu0 0.0
    %676 = vmatprep.subr.mxu0 0.0
    %677 = vmatpush1.msra.mxu0 0.0
    %678 = vmatprep.subr.mxu0 0.0
    %679 = vmatpush1.msra.mxu0 0.0
    %680 = vmatprep.subr.mxu0 0.0
    %681 = vmatpush1.msra.mxu0 0.0
    %682 = vmatprep.subr.mxu0 0.0
    %683 = vmatpush1.msra.mxu0 0.0
    %684 = vmatprep.subr.mxu0 0.0
    %685 = vmatpush1.msra.mxu0 0.0
    %686 = vmatprep.subr.mxu0 0.0
    %687 = vmatpush1.msra.mxu0 0.0
    %688 = vmatprep.mubr.f32.mxu0 0.0
    %689 = vmatmul.mubr.f32.gmra.mrb[0].mxu0 %v622
    %v690 = vpop.f32.mrb[0].mxu0
    %v691 = vadd.f32 %v147, %v690
    %v692 = vpop.f32.mrb[0].mxu0
    %693 = vdwg.mxu0
    %v694 = vrot.slane %v122, 4
    %v696 = vadd.f32 %v691, %v694
    %v697 = vtanh.pop %v696
    %v698 = vtanh.pop %v691
    %v699 = vsel %vm141, %v697, %v698
    %v701 = vsel %vm149, %v699, 0
    %703 = vmatprep.subr.mxu0 0.0
    %704 = vmatpush1.msra.mxu0 %v125
    %705 = vmatprep.subr.mxu0 0.0
    %706 = vmatpush1.msra.mxu0 %v126
    %707 = vmatprep.subr.mxu0 0.0
    %708 = vmatpush1.msra.mxu0 %v127
    %709 = vmatprep.subr.mxu0 0.0
    %710 = vmatpush1.msra.mxu0 %v128
    %711 = vmatprep.subr.mxu0 0.0
    %712 = vmatpush1.msra.mxu0 %v129
    %713 = vmatprep.subr.mxu0 0.0
    %714 = vmatpush1.msra.mxu0 %v130
    %715 = vmatprep.subr.mxu0 0.0
    %716 = vmatpush1.msra.mxu0 %v131
    %717 = vmatprep.subr.mxu0 0.0
    %718 = vmatpush1.msra.mxu0 %v132
    %719 = vmatprep.subr.mxu0 0.0
    %720 = vmatpush1.msra.mxu0 0.0
    %721 = vmatprep.subr.mxu0 0.0
    %722 = vmatpush1.msra.mxu0 0.0
    %723 = vmatprep.subr.mxu0 0.0
    %724 = vmatpush1.msra.mxu0 0.0
    %725 = vmatprep.subr.mxu0 0.0
    %726 = vmatpush1.msra.mxu0 0.0
    %727 = vmatprep.subr.mxu0 0.0
    %728 = vmatpush1.msra.mxu0 0.0
    %729 = vmatprep.subr.mxu0 0.0
    %730 = vmatpush1.msra.mxu0 0.0
    %731 = vmatprep.subr.mxu0 0.0
    %732 = vmatpush1.msra.mxu0 0.0
    %733 = vmatprep.subr.mxu0 0.0
    %734 = vmatpush1.msra.mxu0 0.0
    %735 = vmatprep.subr.mxu0 0.0
    %736 = vmatpush1.msra.mxu0 0.0
    %737 = vmatprep.subr.mxu0 0.0
    %738 = vmatpush1.msra.mxu0 0.0
    %739 = vmatprep.subr.mxu0 0.0
    %740 = vmatpush1.msra.mxu0 0.0
    %741 = vmatprep.subr.mxu0 0.0
    %742 = vmatpush1.msra.mxu0 0.0
    %743 = vmatprep.subr.mxu0 0.0
    %744 = vmatpush1.msra.mxu0 0.0
    %745 = vmatprep.subr.mxu0 0.0
    %746 = vmatpush1.msra.mxu0 0.0
    %747 = vmatprep.subr.mxu0 0.0
    %748 = vmatpush1.msra.mxu0 0.0
    %749 = vmatprep.subr.mxu0 0.0
    %750 = vmatpush1.msra.mxu0 0.0
    %751 = vmatprep.subr.mxu0 0.0
    %752 = vmatpush1.msra.mxu0 0.0
    %753 = vmatprep.subr.mxu0 0.0
    %754 = vmatpush1.msra.mxu0 0.0
    %755 = vmatprep.subr.mxu0 0.0
    %756 = vmatpush1.msra.mxu0 0.0
    %757 = vmatprep.subr.mxu0 0.0
    %758 = vmatpush1.msra.mxu0 0.0
    %759 = vmatprep.subr.mxu0 0.0
    %760 = vmatpush1.msra.mxu0 0.0
    %761 = vmatprep.subr.mxu0 0.0
    %762 = vmatpush1.msra.mxu0 0.0
    %763 = vmatprep.subr.mxu0 0.0
    %764 = vmatpush1.msra.mxu0 0.0
    %765 = vmatprep.subr.mxu0 0.0
    %766 = vmatpush1.msra.mxu0 0.0
    %767 = vmatprep.mubr.f32.mxu0 0.0
    %768 = vmatmul.mubr.f32.gmra.mrb[0].mxu0 %v701
    %v769 = vpop.f32.mrb[0].mxu0
    %v770 = vadd.f32 %v147, %v769
    %v771 = vpop.f32.mrb[0].mxu0
    %772 = vdwg.mxu0
    %v773 = vrot.slane %v122, 6
    %v775 = vadd.f32 %v770, %v773
    %v776 = vtanh.pop %v775
    %v777 = vtanh.pop %v770
    %v778 = vsel %vm141, %v776, %v777
    %v780 = vsel %vm149, %v778, 0
    %782 = vmatprep.subr.mxu0 0.0
    %783 = vmatpush1.msra.mxu0 %v125
    %784 = vmatprep.subr.mxu0 0.0
    %785 = vmatpush1.msra.mxu0 %v126
    %786 = vmatprep.subr.mxu0 0.0
    %787 = vmatpush1.msra.mxu0 %v127
    %788 = vmatprep.subr.mxu0 0.0
    %789 = vmatpush1.msra.mxu0 %v128
    %790 = vmatprep.subr.mxu0 0.0
    %791 = vmatpush1.msra.mxu0 %v129
    %792 = vmatprep.subr.mxu0 0.0
    %793 = vmatpush1.msra.mxu0 %v130
    %794 = vmatprep.subr.mxu0 0.0
    %795 = vmatpush1.msra.mxu0 %v131
    %796 = vmatprep.subr.mxu0 0.0
    %797 = vmatpush1.msra.mxu0 %v132
    %798 = vmatprep.subr.mxu0 0.0
    %799 = vmatpush1.msra.mxu0 0.0
    %800 = vmatprep.subr.mxu0 0.0
    %801 = vmatpush1.msra.mxu0 0.0
    %802 = vmatprep.subr.mxu0 0.0
    %803 = vmatpush1.msra.mxu0 0.0
    %804 = vmatprep.subr.mxu0 0.0
    %805 = vmatpush1.msra.mxu0 0.0
    %806 = vmatprep.subr.mxu0 0.0
    %807 = vmatpush1.msra.mxu0 0.0
    %808 = vmatprep.subr.mxu0 0.0
    %809 = vmatpush1.msra.mxu0 0.0
    %810 = vmatprep.subr.mxu0 0.0
    %811 = vmatpush1.msra.mxu0 0.0
    %812 = vmatprep.subr.mxu0 0.0
    %813 = vmatpush1.msra.mxu0 0.0
    %814 = vmatprep.subr.mxu0 0.0
    %815 = vmatpush1.msra.mxu0 0.0
    %816 = vmatprep.subr.mxu0 0.0
    %817 = vmatpush1.msra.mxu0 0.0
    %818 = vmatprep.subr.mxu0 0.0
    %819 = vmatpush1.msra.mxu0 0.0
    %820 = vmatprep.subr.mxu0 0.0
    %821 = vmatpush1.msra.mxu0 0.0
    %822 = vmatprep.subr.mxu0 0.0
    %823 = vmatpush1.msra.mxu0 0.0
    %824 = vmatprep.subr.mxu0 0.0
    %825 = vmatpush1.msra.mxu0 0.0
    %826 = vmatprep.subr.mxu0 0.0
    %827 = vmatpush1.msra.mxu0 0.0
    %828 = vmatprep.subr.mxu0 0.0
    %829 = vmatpush1.msra.mxu0 0.0
    %830 = vmatprep.subr.mxu0 0.0
    %831 = vmatpush1.msra.mxu0 0.0
    %832 = vmatprep.subr.mxu0 0.0
    %833 = vmatpush1.msra.mxu0 0.0
    %834 = vmatprep.subr.mxu0 0.0
    %835 = vmatpush1.msra.mxu0 0.0
    %836 = vmatprep.subr.mxu0 0.0
    %837 = vmatpush1.msra.mxu0 0.0
    %838 = vmatprep.subr.mxu0 0.0
    %839 = vmatpush1.msra.mxu0 0.0
    %840 = vmatprep.subr.mxu0 0.0
    %841 = vmatpush1.msra.mxu0 0.0
    %842 = vmatprep.subr.mxu0 0.0
    %843 = vmatpush1.msra.mxu0 0.0
    %844 = vmatprep.subr.mxu0 0.0
    %845 = vmatpush1.msra.mxu0 0.0
    %846 = vmatprep.mubr.f32.mxu0 0.0
    %847 = vmatmul.mubr.f32.gmra.mrb[0].mxu0 %v780
    %v848 = vpop.f32.mrb[0].mxu0
    %v849 = vadd.f32 %v147, %v848
    %v850 = vpop.f32.mrb[0].mxu0
    %851 = vdwg.mxu0
    %v852 = vtanh.pop %v849
    %vm853 = vcmask 254976
    %854 = vst.msk [vmem:[#allocation2] sm:$0x3] %vm853, %v776
    %856 = vrot.lane.b32.xlu0 %v852, 96
    %v857 = vpop.permute.xlu0 %856
    %s859 = scalar_lea.vmem [#allocation2], 2
    %860 = vst.msk [vmem:[%s859] sm:$0x3] %vm853, %v857
    %v862 = vrot.slane %v383, 6
    %v865 = vrot.slane %v462, 4
    %v868 = vrot.slane %v539, 2
    %v871 = vrot.slane %v698, 6
    %v874 = vrot.slane %v777, 4
    %v876 = vrot.slane %v852, 2
    %vm878 = vcmask 1041408
    %v879 = vsel %vm878, %v304, %v862
    %vm880 = vcmask 1043456
    %v881 = vsel %vm880, %v879, %v865
    %vm882 = vcmask 1045504
    %v883 = vsel %vm882, %v881, %v868
    %v884 = vsel %vm878, %v619, %v871
    %v885 = vsel %vm880, %v884, %v874
    %v886 = vsel %vm882, %v885, %v876
    %v887 = vld [vmem:[%s6] sm:$0xff]
    %v888 = vld [vmem:[%s6 + $0x8] sm:$0xff]
    %v889 = vld [vmem:[%s6 + $0x10] sm:$0xff]
    %v890 = vld [vmem:[%s6 + $0x18] sm:$0xff]
    %v891 = vld [vmem:[%s7] sm:$0x1]
    %v893 = vlaneseq
    %v894 = vshrl.u32 %v893, 7
    %v895 = vsub.s32 0, %v894
    %v896 = vrot.slane %v891, %v895
    %900 = vrot.lane.b32.xlu0 %v883, 96
    %v901 = vpop.permute.xlu0 %900
    %902 = vrot.lane.b32.xlu0 %v886, 96
    %v903 = vpop.permute.xlu0 %902
    %v904 = vsel %vm141, %v901, 0
    %v906 = vsel %vm141, %v903, 0
    %908 = vmatprep.subr.mxu0 0.0
    %909 = vmatpush1.msra.mxu0 %v887
    %910 = vmatprep.subr.mxu0 0.0
    %911 = vmatpush1.msra.mxu0 %v888
    %912 = vmatprep.subr.mxu0 0.0
    %913 = vmatpush1.msra.mxu0 %v889
    %914 = vmatprep.subr.mxu0 0.0
    %915 = vmatpush1.msra.mxu0 %v890
    %916 = vmatprep.subr.mxu0 0.0
    %917 = vmatpush1.msra.mxu0 0.0
    %918 = vmatprep.subr.mxu0 0.0
    %919 = vmatpush1.msra.mxu0 0.0
    %920 = vmatprep.subr.mxu0 0.0
    %921 = vmatpush1.msra.mxu0 0.0
    %922 = vmatprep.subr.mxu0 0.0
    %923 = vmatpush1.msra.mxu0 0.0
    %924 = vmatprep.subr.mxu0 0.0
    %925 = vmatpush1.msra.mxu0 0.0
    %926 = vmatprep.subr.mxu0 0.0
    %927 = vmatpush1.msra.mxu0 0.0
    %928 = vmatprep.subr.mxu0 0.0
    %929 = vmatpush1.msra.mxu0 0.0
    %930 = vmatprep.subr.mxu0 0.0
    %931 = vmatpush1.msra.mxu0 0.0
    %932 = vmatprep.subr.mxu0 0.0
    %933 = vmatpush1.msra.mxu0 0.0
    %934 = vmatprep.subr.mxu0 0.0
    %935 = vmatpush1.msra.mxu0 0.0
    %936 = vmatprep.subr.mxu0 0.0
    %937 = vmatpush1.msra.mxu0 0.0
    %938 = vmatprep.subr.mxu0 0.0
    %939 = vmatpush1.msra.mxu0 0.0
    %940 = vmatprep.subr.mxu0 0.0
    %941 = vmatpush1.msra.mxu0 0.0
    %942 = vmatprep.subr.mxu0 0.0
    %943 = vmatpush1.msra.mxu0 0.0
    %944 = vmatprep.subr.mxu0 0.0
    %945 = vmatpush1.msra.mxu0 0.0
    %946 = vmatprep.subr.mxu0 0.0
    %947 = vmatpush1.msra.mxu0 0.0
    %948 = vmatprep.subr.mxu0 0.0
    %949 = vmatpush1.msra.mxu0 0.0
    %950 = vmatprep.subr.mxu0 0.0
    %951 = vmatpush1.msra.mxu0 0.0
    %952 = vmatprep.subr.mxu0 0.0
    %953 = vmatpush1.msra.mxu0 0.0
    %954 = vmatprep.subr.mxu0 0.0
    %955 = vmatpush1.msra.mxu0 0.0
    %956 = vmatprep.subr.mxu0 0.0
    %957 = vmatpush1.msra.mxu0 0.0
    %958 = vmatprep.subr.mxu0 0.0
    %959 = vmatpush1.msra.mxu0 0.0
    %960 = vmatprep.subr.mxu0 0.0
    %961 = vmatpush1.msra.mxu0 0.0
    %962 = vmatprep.subr.mxu0 0.0
    %963 = vmatpush1.msra.mxu0 0.0
    %964 = vmatprep.subr.mxu0 0.0
    %965 = vmatpush1.msra.mxu0 0.0
    %966 = vmatprep.subr.mxu0 0.0
    %967 = vmatpush1.msra.mxu0 0.0
    %968 = vmatprep.subr.mxu0 0.0
    %969 = vmatpush1.msra.mxu0 0.0
    %970 = vmatprep.subr.mxu0 0.0
    %971 = vmatpush1.msra.mxu0 0.0
    %972 = vmatprep.mubr.f32.mxu0 0.0
    %973 = vmatmul.mubr.f32.gmra.mrb[0].mxu0 %v904
    %v974 = vpop.f32.mrb[0].mxu0
    %v975 = vadd.f32 %v896, %v974
    %v976 = vpop.f32.mrb[0].mxu0
    %977 = vmatprep.mubr.f32.mxu0 0.0
    %978 = vmatmul.mubr.f32.gmra.mrb[0].mxu0 %v906
    %v979 = vpop.f32.mrb[0].mxu0
    %v980 = vadd.f32 %v896, %v979
    %v981 = vpop.f32.mrb[0].mxu0
    %982 = vdwg.mxu0
    %983 = vst.msk [vmem:[%s8] sm:$0xff] %vm43, %v975
    %984 = vst.msk [vmem:[%s8 + $0x8] sm:$0xff] %vm43, %v980
    // Predicated region
    $region34: #{char_rnn_forward.1} parent=1 // pred_check
      _
    $region35: #{char_rnn_forward.1} parent=1 // pred_check_branch
      %986 = sbr.rel (0) target = $region37
    $region36: #{char_rnn_forward.1} parent=1 // pred_region
      _
    $region37: #{char_rnn_forward.1} parent=1 // pred_fallthru
      _
    // Predicated region
    $region38: #{char_rnn_forward.1} parent=1 // pred_check
      _
    $region39: #{char_rnn_forward.1} parent=1 // pred_check_branch
      %988 = sbr.rel (0) target = $region41
    $region40: #{char_rnn_forward.1} parent=1 // pred_region
      %s990 = ssub.s32 64, 64
      %991 = vsyncadd [#allocation3], %s990
      %s992 = sshll.u32 [#allocation2], 4
      %s993 = int_to_ptr.vmem [resolvable:$true] %s992
      %998 = dma.vmem_to_hbm [thread:$0]  %s993, 64, %s9, [#allocation3], 32, 32, 2
    $region41: #{char_rnn_forward.1} parent=1 // pred_fallthru
      _
    // Predicated region
    $region42: #{char_rnn_forward.1} parent=1 // pred_check
      _
    $region43: #{char_rnn_forward.1} parent=1 // pred_check_branch
      %1000 = sbr.rel (0) target = $region45
    $region44: #{char_rnn_forward.1} parent=1 // pred_region
      _
    $region45: #{char_rnn_forward.1} parent=1 // pred_fallthru
      _
    // Predicated region
    $region46: #{char_rnn_forward.1} parent=1 // pred_check
      _
    $region47: #{char_rnn_forward.1} parent=1 // pred_check_branch
      %1002 = sbr.rel (0) target = $region49
    $region48: #{char_rnn_forward.1} parent=1 // pred_region
      %1003 = dma.done [#allocation3], 64
    $region49: #{char_rnn_forward.1} parent=1 // pred_fallthru
      _
    %1004 = vsyncpa [#allocation3], 1

</llo_original>
